<compile_context>
chip_gen: v7x
topology: tpu7x:2x2x1
jax: 0.10.0
libtpu: 0.0.40
codegen_flags: <defaults>
</compile_context>

<pallas_src>
import jax
import jax.numpy as jnp
from jax.experimental import pallas as pl
from jax.experimental.pallas import tpu as pltpu


def _excite(y, w1, w2):
    """Excitation MLP.  y: (Bblk, C) f32; w1: (Cr, C); w2: (C, Cr) (out, in)."""
    h = jnp.einsum("bc,oc->bo", y, w1.astype(jnp.float32),
                   preferred_element_type=jnp.float32)          # (Bblk, Cr)
    h = jnp.maximum(h, 0.0)
    s = jnp.einsum("bo,co->bc", h, w2.astype(jnp.float32),
                   preferred_element_type=jnp.float32)          # (Bblk, C)
    return jax.nn.sigmoid(s)


def se_kernel_cf(x_ref, w1_ref, w2_ref, o_ref):
    # channels-first block: x_ref (Bblk, C, HW) — HW on lanes, C on sublanes.
    y = jnp.mean(x_ref[...], axis=-1, dtype=jnp.float32)        # (Bblk, C), f32 acc
    s = _excite(y, w1_ref[...], w2_ref[...])                    # (Bblk, C)
    # Scale in native dtype: single VPU pass, s lane-broadcast along HW.
    o_ref[...] = x_ref[...] * s.astype(o_ref.dtype)[:, :, None]


def se_kernel_cl(x_ref, w1_ref, w2_ref, o_ref):
    # channels-last block: x_ref (Bblk, HW, C) — C on lanes (lane-dense store).
    y = jnp.mean(x_ref[...], axis=1, dtype=jnp.float32)         # (Bblk, C), f32 acc
    s = _excite(y, w1_ref[...], w2_ref[...])                    # (Bblk, C)
    o_ref[...] = x_ref[...] * s.astype(o_ref.dtype)[:, None, :]


def _pick_batch_block(B, bytes_per_sample, target_bytes=2 << 20):
    """Largest divisor of B with block <= ~target bytes; keep >=2 grid steps."""
    cap = max(1, target_bytes // max(1, bytes_per_sample))
    if B >= 2:
        # Keep at least two "parallel" grid steps so both v7x TCs get work.
        cap = min(cap, max(1, B // 2))
    best = 1
    for d in range(1, min(B, cap) + 1):
        if B % d == 0:
            best = d
    return best


def se_layer(x, w1, w2):
    """SELayer forward.  x: (B, C, H, W); w1: (C//r, C); w2: (C, C//r)."""
    B, C, H, W = x.shape
    Cr = w1.shape[0]
    HW = H * W

    # Layout choice for a lane-dense stored output (biggest single lever):
    # keep (C, HW) when HW is a 128-multiple, otherwise flip to (HW, C) when C is.
    channels_last = (HW % 128 != 0) and (C % 128 == 0)
    if channels_last:
        x3 = jnp.transpose(x.reshape(B, C, HW), (0, 2, 1))      # (B, HW, C)
        blk_tail = (HW, C)
        kernel = se_kernel_cl
    else:
        x3 = x.reshape(B, C, HW)                                # (B, C, HW)
        blk_tail = (C, HW)
        kernel = se_kernel_cf

    bblk = _pick_batch_block(B, C * HW * x.dtype.itemsize)
    grid = (B // bblk,)
    block = (bblk,) + blk_tail

    # Advisory cost: short, memory-bound custom call (lets XLA overlap it).
    cost = pl.CostEstimate(
        flops=2 * B * C * HW + 4 * B * C * Cr,
        transcendentals=B * C,
        bytes_accessed=2 * B * C * HW * x.dtype.itemsize
        + (w1.size + w2.size) * w1.dtype.itemsize,
    )

    out = pl.pallas_call(
        kernel,
        out_shape=jax.ShapeDtypeStruct(x3.shape, x.dtype),
        grid_spec=pltpu.PrefetchScalarGridSpec(
            num_scalar_prefetch=0,
            grid=grid,
            in_specs=[
                pl.BlockSpec(block, lambda b: (b, 0, 0)),
                pl.BlockSpec((Cr, C), lambda b: (0, 0)),
                pl.BlockSpec((C, Cr), lambda b: (0, 0)),
            ],
            out_specs=pl.BlockSpec(block, lambda b: (b, 0, 0)),
        ),
        compiler_params=pltpu.CompilerParams(
            dimension_semantics=("parallel",)),
        cost_estimate=cost,
    )(x3, w1, w2)

    if channels_last:
        return jnp.transpose(out, (0, 2, 1)).reshape(B, C, H, W)
    return out.reshape(B, C, H, W)


if __name__ == "__main__":
    # SELayer(channel=32, reduction=16) -> hidden = 2
    B, C, H, W = 2, 32, 16, 16
    reduction = 16
    Cr = C // reduction

    key = jax.random.PRNGKey(0)
    kx, k1, k2 = jax.random.split(key, 3)

    x = jax.random.normal(kx, (B, C, H, W), dtype=jnp.float32)
    # PyTorch Linear weight shapes: (out_features, in_features), no bias.
    w1 = jax.random.normal(k1, (Cr, C), dtype=jnp.float32) * (1.0 / jnp.sqrt(C))
    w2 = jax.random.normal(k2, (C, Cr), dtype=jnp.float32) * (1.0 / jnp.sqrt(Cr))

    out = se_layer(x, w1, w2)
    out = jax.block_until_ready(out)

    # reference check in plain JAX
    y_ref = jnp.mean(x, axis=(2, 3))                       # (B, C)
    h_ref = jnp.maximum(y_ref @ w1.T, 0.0)                 # (B, Cr)
    s_ref = jax.nn.sigmoid(h_ref @ w2.T)                   # (B, C)
    ref = x * s_ref[:, :, None, None]
    assert jnp.allclose(out, ref, atol=1e-5, rtol=1e-5), "mismatch vs reference"

    print("KERNEL_OK")
</pallas_src>

<mosaic_0001>
module attributes {stable_mosaic.version = 11 : i64} {
  func.func @se_kernel_cf(%arg0: i32, %arg1: memref<1x32x256xf32, #tpu.memory_space<vmem>>, %arg2: memref<2x32xf32, #tpu.memory_space<vmem>>, %arg3: memref<32x2xf32, #tpu.memory_space<vmem>>, %arg4: memref<1x32x256xf32, #tpu.memory_space<vmem>>) attributes {dimension_semantics = [#tpu.dimension_semantics<parallel>], iteration_bounds = array<i64: 2>, scalar_prefetch = 0 : i64, scratch_operands = 0 : i64, tpu.core_type = #tpu.core_type<tc>, window_params = [{transform_indices = @transform_0, window_bounds = array<i64: 1, 32, 256>}, {pipeline_mode = #tpu.pipeline_mode<synchronous>, transform_indices = @transform_1, window_bounds = array<i64: 2, 32>}, {pipeline_mode = #tpu.pipeline_mode<synchronous>, transform_indices = @transform_2, window_bounds = array<i64: 32, 2>}, {transform_indices = @transform_3, window_bounds = array<i64: 1, 32, 256>}]} {
    %c0 = arith.constant 0 : index
    %c0_0 = arith.constant 0 : index
    %c0_1 = arith.constant 0 : index
    %0 = vector.load %arg1[%c0, %c0_0, %c0_1] : memref<1x32x256xf32, #tpu.memory_space<vmem>>, vector<1x32x256xf32>
    %cst = arith.constant dense<0.000000e+00> : vector<1x32xf32>
    %1 = vector.multi_reduction <add>, %0, %cst [2] : vector<1x32x256xf32> to vector<1x32xf32>
    %cst_2 = arith.constant 2.560000e+02 : f32
    %2 = vector.broadcast %cst_2 : f32 to vector<1x32xf32>
    %3 = arith.divf %1, %2 : vector<1x32xf32>
    %c0_3 = arith.constant 0 : index
    %c0_4 = arith.constant 0 : index
    %4 = vector.load %arg2[%c0_3, %c0_4] : memref<2x32xf32, #tpu.memory_space<vmem>>, vector<2x32xf32>
    %c0_5 = arith.constant 0 : index
    %c0_6 = arith.constant 0 : index
    %5 = vector.load %arg3[%c0_5, %c0_6] : memref<32x2xf32, #tpu.memory_space<vmem>>, vector<32x2xf32>
    "tpu.trace_start"() <{level = 10 : i32, message = "bc,oc->bo"}> : () -> ()
    %cst_7 = arith.constant dense<0.000000e+00> : vector<1x2xf32>
    %6 = tpu.matmul %3, %4, %cst_7 {dimension_numbers = #tpu.dot_dimension_numbers<[1], [1], [0], [0], [0, 0, 1, 0], [], []>} : vector<1x32xf32>, vector<2x32xf32>, vector<1x2xf32> -> vector<1x2xf32>
    "tpu.trace_stop"() : () -> ()
    %cst_8 = arith.constant 0.000000e+00 : f32
    %7 = vector.broadcast %cst_8 : f32 to vector<1x2xf32>
    %8 = arith.maximumf %6, %7 : vector<1x2xf32>
    "tpu.trace_start"() <{level = 10 : i32, message = "bo,co->bc"}> : () -> ()
    %cst_9 = arith.constant dense<0.000000e+00> : vector<1x32xf32>
    %9 = tpu.matmul %8, %5, %cst_9 {dimension_numbers = #tpu.dot_dimension_numbers<[1], [1], [0], [0], [0, 0, 1, 0], [], []>} : vector<1x2xf32>, vector<32x2xf32>, vector<1x32xf32> -> vector<1x32xf32>
    "tpu.trace_stop"() : () -> ()
    %10 = arith.negf %9 : vector<1x32xf32>
    %11 = math.exp %10 : vector<1x32xf32>
    %cst_10 = arith.constant 1.000000e+00 : f32
    %12 = vector.broadcast %cst_10 : f32 to vector<1x32xf32>
    %13 = arith.addf %12, %11 : vector<1x32xf32>
    %14 = arith.divf %12, %13 : vector<1x32xf32>
    %c0_11 = arith.constant 0 : index
    %c0_12 = arith.constant 0 : index
    %c0_13 = arith.constant 0 : index
    %15 = vector.load %arg1[%c0_11, %c0_12, %c0_13] : memref<1x32x256xf32, #tpu.memory_space<vmem>>, vector<1x32x256xf32>
    %16 = vector.shape_cast %14 : vector<1x32xf32> to vector<1x32x1xf32>
    %17 = vector.broadcast %16 : vector<1x32x1xf32> to vector<1x32x256xf32>
    %18 = arith.mulf %15, %17 : vector<1x32x256xf32>
    %c0_14 = arith.constant 0 : index
    %c0_15 = arith.constant 0 : index
    %c0_16 = arith.constant 0 : index
    %19 = vector.load %arg4[%c0_14, %c0_15, %c0_16] : memref<1x32x256xf32, #tpu.memory_space<vmem>>, vector<1x32x256xf32>
    tpu.vector_store %arg4[%c0_14, %c0_15, %c0_16], %18 {strides = array<i32>} : memref<1x32x256xf32, #tpu.memory_space<vmem>>, vector<1x32x256xf32>,
    return
  }
  func.func @transform_0(%arg0: i32) -> (i32, i32, i32) {
    %c0_i32 = arith.constant 0 : i32
    %c0_i32_0 = arith.constant 0 : i32
    %c0_i32_1 = arith.constant 0 : i32
    return %arg0, %c0_i32, %c0_i32_0 : i32, i32, i32
  }
  func.func @transform_1(%arg0: i32) -> (i32, i32) {
    %c0_i32 = arith.constant 0 : i32
    %c0_i32_0 = arith.constant 0 : i32
    %c0_i32_1 = arith.constant 0 : i32
    return %c0_i32, %c0_i32_0 : i32, i32
  }
  func.func @transform_2(%arg0: i32) -> (i32, i32) {
    %c0_i32 = arith.constant 0 : i32
    %c0_i32_0 = arith.constant 0 : i32
    %c0_i32_1 = arith.constant 0 : i32
    return %c0_i32, %c0_i32_0 : i32, i32
  }
  func.func @transform_3(%arg0: i32) -> (i32, i32, i32) {
    %c0_i32 = arith.constant 0 : i32
    %c0_i32_0 = arith.constant 0 : i32
    %c0_i32_1 = arith.constant 0 : i32
    return %arg0, %c0_i32, %c0_i32_0 : i32, i32, i32
  }
}

</mosaic_0001>

<llo_original>
// kernel: tpu_custom_call.1
$region0: #{tpu_custom_call.1}
  #allocation0 [shape = 'u32[]', space=smem, size = 0x4, offset = 0x4, fixed_abs, tag = 'smem constant byte address 0x4 - core index']
  #allocation1 [shape = 'u32[144,128]{1,0:T(1,128)}', space=vmem, size = 0x12000, scoped, tag = 'internal scratch']
  %s0 = inlined_call_operand.hbm [shape: f32[2,32,256], index: 0, kind: input, shape index: {}]
  %s1 = inlined_call_operand.vmem [shape: f32[2,32], index: 1, kind: input, shape index: {}]
  %s2 = inlined_call_operand.vmem [shape: f32[32,2], index: 2, kind: input, shape index: {}]
  %s3 = inlined_call_operand.hbm [shape: f32[2,32,256], index: 3, kind: output, shape index: {}]
  %s4 = sld [smem:[#allocation0]]
  $region49: #{tpu_custom_call.1} parent=0
    _
  %s6 = ssub.s32 1, %s4
  %s7 = scalar_select 0, %s6, %s4
  $region1: #{tpu_custom_call.1} parent=0
    #allocation2 [shape = 'u8[65536]{0}', space=vmem, size = 0x10000, scoped, tag = 'input window, operand 0']
    #allocation3 [shape = 's32[2]{0}', space=sflag, size = 0x8, scoped, tag = 'scoped memory for tpu_custom_call.1']
    #allocation4 [shape = 's32[2]{0}', space=sflag, size = 0x8, scoped, tag = 'scoped memory for tpu_custom_call.1']
    #allocation5 [shape = 'u8[65536]{0}', space=vmem, size = 0x10000, scoped, tag = 'output window, operand 0']
    %8 = vsyncpa [#allocation3], 0
    %s9 = scalar_lea.sflag [#allocation3], 1
    %10 = vsyncpa %s9, 0
    %11 = vsyncpa [#allocation4], 0
    %s12 = scalar_lea.sflag [#allocation4], 1
    %13 = vsyncpa %s12, 0
    loop: start=0, step=1, limit=4
    $region2: #{tpu_custom_call.1} parent=1 // loop_pre_header
      _
    $region3: #{tpu_custom_call.1} parent=1 // loop_header
      %s15 = sphi 0, %s19
      %p16 = scmp.ge.s32.totalorder %s15, 4
      %s25 = sphi 0, %s27
      %s28 = sphi 0, %s25
      %s29 = sphi 0, %s28
      %s45 = sphi 0, %s29
      %s49 = sphi 0, %s49
      %s51 = sphi 0, %s49
      %s52 = sphi 0, %s51
      %s66 = sphi 0, %s52
      %s70 = sphi 0, %s70
      %s72 = sphi 0, %s70
      %s73 = sphi 0, %s72
      %s87 = sphi 0, %s73
      %s93 = sphi 0, %s95
      %s96 = sphi 0, %s93
      %s97 = sphi 0, %s96
      %s113 = sphi 0, %s97
    $region4: #{tpu_custom_call.1} parent=1 // loop_header_branch
      %18 = sbr.rel (%p16) target = $region8
    $region5: #{tpu_custom_call.1} parent=1 // loop_body
      %s20 = ssub.s32 %s15, 1
      %s21 = ssub.s32 %s15, 2
      %s22 = sadd.s32 %s15, 1
      %s23 = ssub.s32 %s15, %s22
      %p24 = scmp.eq.s32.totalorder %s23, 0
      %s26 = sadd.s32 %s25, 1
      %s27 = scalar_select %p24, %s25, %s26
      %p30 = pneg %p24
      %p31 = scmp.eq.s32.totalorder %s15, 1
      %p32 = por %p30, %p31
      %p33 = scmp.ne.s32.totalorder %s25, %s28
      %p34 = scmp.eq.s32.totalorder %s15, 0
      %p35 = por %p33, %p34
      %p36 = scmp.ne.s32.totalorder %s25, %s28
      %p37 = scmp.eq.s32.totalorder %s20, 1
      %p38 = por %p36, %p37
      %p39 = scmp.ne.s32.totalorder %s28, %s29
      %p40 = scmp.eq.s32.totalorder %s20, 0
      %p41 = por %p39, %p40
      %p42 = scmp.ne.s32.totalorder %s28, %s29
      %p43 = scmp.eq.s32.totalorder %s21, 1
      %p44 = por %p42, %p43
      %p46 = scmp.ne.s32.totalorder %s29, %s45
      %p47 = scmp.eq.s32.totalorder %s21, 0
      %p48 = por %p46, %p47
      %s50 = sadd.s32 %s49, 1
      %p53 = scmp.eq.s32.totalorder %s15, 1
      %p54 = scmp.ne.s32.totalorder %s49, %s51
      %p55 = scmp.eq.s32.totalorder %s15, 0
      %p56 = por %p54, %p55
      %p57 = scmp.ne.s32.totalorder %s49, %s51
      %p58 = scmp.eq.s32.totalorder %s20, 1
      %p59 = por %p57, %p58
      %p60 = scmp.ne.s32.totalorder %s51, %s52
      %p61 = scmp.eq.s32.totalorder %s20, 0
      %p62 = por %p60, %p61
      %p63 = scmp.ne.s32.totalorder %s51, %s52
      %p64 = scmp.eq.s32.totalorder %s21, 1
      %p65 = por %p63, %p64
      %p67 = scmp.ne.s32.totalorder %s52, %s66
      %p68 = scmp.eq.s32.totalorder %s21, 0
      %p69 = por %p67, %p68
      %s71 = sadd.s32 %s70, 1
      %p74 = scmp.eq.s32.totalorder %s15, 1
      %p75 = scmp.ne.s32.totalorder %s70, %s72
      %p76 = scmp.eq.s32.totalorder %s15, 0
      %p77 = por %p75, %p76
      %p78 = scmp.ne.s32.totalorder %s70, %s72
      %p79 = scmp.eq.s32.totalorder %s20, 1
      %p80 = por %p78, %p79
      %p81 = scmp.ne.s32.totalorder %s72, %s73
      %p82 = scmp.eq.s32.totalorder %s20, 0
      %p83 = por %p81, %p82
      %p84 = scmp.ne.s32.totalorder %s72, %s73
      %p85 = scmp.eq.s32.totalorder %s21, 1
      %p86 = por %p84, %p85
      %p88 = scmp.ne.s32.totalorder %s73, %s87
      %p89 = scmp.eq.s32.totalorder %s21, 0
      %p90 = por %p88, %p89
      %s91 = ssub.s32 %s15, %s22
      %p92 = scmp.eq.s32.totalorder %s91, 0
      %s94 = sadd.s32 %s93, 1
      %s95 = scalar_select %p92, %s93, %s94
      %p98 = pneg %p92
      %p99 = scmp.eq.s32.totalorder %s15, 1
      %p100 = por %p98, %p99
      %p101 = scmp.ne.s32.totalorder %s93, %s96
      %p102 = scmp.eq.s32.totalorder %s15, 0
      %p103 = por %p101, %p102
      %p104 = scmp.ne.s32.totalorder %s93, %s96
      %p105 = scmp.eq.s32.totalorder %s20, 1
      %p106 = por %p104, %p105
      %p107 = scmp.ne.s32.totalorder %s96, %s97
      %p108 = scmp.eq.s32.totalorder %s20, 0
      %p109 = por %p107, %p108
      %p110 = scmp.ne.s32.totalorder %s96, %s97
      %p111 = scmp.eq.s32.totalorder %s21, 1
      %p112 = por %p110, %p111
      %p114 = scmp.ne.s32.totalorder %s97, %s113
      %p115 = scmp.eq.s32.totalorder %s21, 0
      %p116 = por %p114, %p115
      %p117 = scmp.le.s32.totalorder 1, %s15
      %p118 = scmp.lt.s32.totalorder %s15, 3
      %p119 = pnand %p117, %p118
      %p120 = pneg %p119
      // Predicated region
      $region9: #{tpu_custom_call.1} parent=5 // pred_check
        _
      $region10: #{tpu_custom_call.1} parent=5 // pred_check_branch
        %122 = sbr.rel (%p119) target = $region12
      $region11: #{tpu_custom_call.1} parent=5 // pred_region
        %s123 = ssub.s32 %s15, 1
        // Predicated region
        $region13: #{tpu_custom_call.1} parent=11 // pred_check
          %p124 = pneg %p62
        $region14: #{tpu_custom_call.1} parent=11 // pred_check_branch
          %126 = sbr.rel (%p124) target = $region16
        $region15: #{tpu_custom_call.1} parent=11 // pred_region
          _
        $region16: #{tpu_custom_call.1} parent=11 // pred_fallthru
          _
        // Predicated region
        $region17: #{tpu_custom_call.1} parent=11 // pred_check
          %p127 = pneg %p83
        $region18: #{tpu_custom_call.1} parent=11 // pred_check_branch
          %129 = sbr.rel (%p127) target = $region20
        $region19: #{tpu_custom_call.1} parent=11 // pred_region
          _
        $region20: #{tpu_custom_call.1} parent=11 // pred_fallthru
          _
      $region12: #{tpu_custom_call.1} parent=5 // pred_fallthru
        _
      %p130 = scmp.lt.s32.totalorder %s15, 2
      // Predicated region
      $region21: #{tpu_custom_call.1} parent=5 // pred_check
        %p131 = pneg %p130
      $region22: #{tpu_custom_call.1} parent=5 // pred_check_branch
        %133 = sbr.rel (%p131) target = $region24
      $region23: #{tpu_custom_call.1} parent=5 // pred_region
        // Predicated region
        $region25: #{tpu_custom_call.1} parent=23 // pred_check
          %p134 = pneg %p35
        $region26: #{tpu_custom_call.1} parent=23 // pred_check_branch
          %136 = sbr.rel (%p134) target = $region28
        $region27: #{tpu_custom_call.1} parent=23 // pred_region
          %s137 = sand.u32 %s25, 1
          %s138 = scalar_lea.sflag [#allocation3], %s137
          %s139 = sand.u32 %s25, 1
          %s140 = smul.addr %s139, 64
          %s141 = scalar_lea.vmem [#allocation2], %s140
          %s143 = ssub.s32 1024, 1024
          %144 = vsyncadd %s138, %s143
          %s145 = smul.addr %s15, 8
          %s146 = smul.addr %s145, 128
          %s147 = scalar_lea.hbm %s0, %s146
          %s148 = sshll.u32 %s141, 4
          %s149 = int_to_ptr.vmem [resolvable:$true] %s148
          %154 = dma.hbm_to_vmem [thread:$0]  %s147, 1024, %s149, %s138, 256, 256, 16
        $region28: #{tpu_custom_call.1} parent=23 // pred_fallthru
          _
      $region24: #{tpu_custom_call.1} parent=5 // pred_fallthru
        _
      %p155 = scmp.le.s32.totalorder 1, %s15
      %p156 = scmp.lt.s32.totalorder %s15, 3
      %p157 = pnand %p155, %p156
      %p158 = pneg %p157
      // Predicated region
      $region29: #{tpu_custom_call.1} parent=5 // pred_check
        _
      $region30: #{tpu_custom_call.1} parent=5 // pred_check_branch
        %160 = sbr.rel (%p157) target = $region32
      $region31: #{tpu_custom_call.1} parent=5 // pred_region
        %s161 = ssub.s32 %s15, 1
        %s162 = sand.u32 %s28, 1
        %s163 = scalar_lea.sflag [#allocation3], %s162
        %s164 = sand.u32 %s28, 1
        %s165 = smul.addr %s164, 64
        %s166 = scalar_lea.vmem [#allocation2], %s165
        // Predicated region
        $region33: #{tpu_custom_call.1} parent=31 // pred_check
          %p167 = pneg %p41
        $region34: #{tpu_custom_call.1} parent=31 // pred_check_branch
          %169 = sbr.rel (%p167) target = $region36
        $region35: #{tpu_custom_call.1} parent=31 // pred_region
          %170 = dma.done %s163, 1024
        $region36: #{tpu_custom_call.1} parent=31 // pred_fallthru
          _
        %s171 = sand.u32 %s28, 1
        %s172 = scalar_lea.sflag [#allocation3], %s171
        %s173 = sand.u32 %s28, 1
        %s174 = smul.addr %s173, 64
        %s175 = scalar_lea.vmem [#allocation2], %s174
        %p176 = pneg %p41
        %p177 = pneg %p38
        %p178 = pneg %p62
        %p179 = pneg %p59
        %p180 = pneg %p83
        %p181 = pneg %p80
        %p182 = pneg %p109
        %p183 = pneg %p106
        %s184 = sand.u32 %s96, 1
        %s185 = scalar_lea.sflag [#allocation4], %s184
        %s186 = sand.u32 %s96, 1
        %s187 = smul.addr %s186, 64
        %s188 = scalar_lea.vmem [#allocation5], %s187
        %v189 = vld [vmem:[%s166] sm:$0xff]
        %v190 = vld [vmem:[%s166 + $0x8] sm:$0xff]
        %v191 = vld [vmem:[%s166 + $0x10] sm:$0xff]
        %v192 = vld [vmem:[%s166 + $0x18] sm:$0xff]
        %v193 = vld [vmem:[%s166 + $0x20] sm:$0xff]
        %v194 = vld [vmem:[%s166 + $0x28] sm:$0xff]
        %v195 = vld [vmem:[%s166 + $0x30] sm:$0xff]
        %v196 = vld [vmem:[%s166 + $0x38] sm:$0xff]
        %v197 = vadd.f32 %v189, %v190
        %198 = vadd.xlane.f32.xlu0 %v197
        %v199 = vpop.xlane.xlu0 %198
        %v200 = vadd.f32 %v191, %v192
        %201 = vadd.xlane.f32.xlu0 %v200
        %v202 = vpop.xlane.xlu0 %201
        %v203 = vadd.f32 %v193, %v194
        %204 = vadd.xlane.f32.xlu0 %v203
        %v205 = vpop.xlane.xlu0 %204
        %v206 = vadd.f32 %v195, %v196
        %207 = vadd.xlane.f32.xlu0 %v206
        %v208 = vpop.xlane.xlu0 %207
        %v209 = vrcp.pop 256.0
        %v210 = vmul.f32 %v199, %v209
        %v211 = vmul.f32 %v202, %v209
        %v212 = vmul.f32 %v205, %v209
        %v213 = vmul.f32 %v208, %v209
        %v214 = vld [vmem:[%s1] sm:$0x3]
        %v215 = vld [vmem:[%s2] sm:$0xff]
        %v216 = vld [vmem:[%s2 + $0x8] sm:$0xff]
        %v217 = vld [vmem:[%s2 + $0x10] sm:$0xff]
        %v218 = vld [vmem:[%s2 + $0x18] sm:$0xff]
        %v223 = vlaneseq
        %v224 = vand.u32 %v223, 127
        %v225 = vlaneseq
        %v226 = vshrl.u32 %v225, 7
        %v227 = vsub.s32 %v224, %v226
        %v228 = vrot.slane %v210, %v227
        %v229 = vadd.s32 %v224, 4294967288
        %v230 = vlaneseq
        %v231 = vshrl.u32 %v230, 7
        %v232 = vsub.s32 %v229, %v231
        %v233 = vrot.slane %v211, %v232
        %vm234 = vcmask 130112
        %v235 = vsel %vm234, %v233, %v228
        %v236 = vadd.s32 %v224, 4294967280
        %v237 = vlaneseq
        %v238 = vshrl.u32 %v237, 7
        %v239 = vsub.s32 %v236, %v238
        %v240 = vrot.slane %v212, %v239
        %vm241 = vcmask 195712
        %v242 = vsel %vm241, %v240, %v235
        %v243 = vadd.s32 %v224, 4294967272
        %v244 = vlaneseq
        %v245 = vshrl.u32 %v244, 7
        %v246 = vsub.s32 %v243, %v245
        %v247 = vrot.slane %v213, %v246
        %vm248 = vcmask 261312
        %v249 = vsel %vm248, %v247, %v242
        %vm250 = vcmask 261120
        %v251 = vsel %vm250, %v249, 0
        %v254 = vsel %vm250, %v214, 0
        %256 = vmatprep.subr.mxu0 0.0
        %257 = vmatpush1.xpose.msra.mxu0 %v254
        %258 = vmatprep.subr.mxu0 0.0
        %259 = vmatpush1.xpose.msra.mxu0 0.0
        %260 = vmatprep.subr.mxu0 0.0
        %261 = vmatpush1.xpose.msra.mxu0 0.0
        %262 = vmatprep.subr.mxu0 0.0
        %263 = vmatpush1.xpose.msra.mxu0 0.0
        %264 = vmatprep.subr.mxu0 0.0
        %265 = vmatpush1.xpose.msra.mxu0 0.0
        %266 = vmatprep.subr.mxu0 0.0
        %267 = vmatpush1.xpose.msra.mxu0 0.0
        %268 = vmatprep.subr.mxu0 0.0
        %269 = vmatpush1.xpose.msra.mxu0 0.0
        %270 = vmatprep.subr.mxu0 0.0
        %271 = vmatpush1.xpose.msra.mxu0 0.0
        %272 = vmatprep.subr.mxu0 0.0
        %273 = vmatpush1.xpose.msra.mxu0 0.0
        %274 = vmatprep.subr.mxu0 0.0
        %275 = vmatpush1.xpose.msra.mxu0 0.0
        %276 = vmatprep.subr.mxu0 0.0
        %277 = vmatpush1.xpose.msra.mxu0 0.0
        %278 = vmatprep.subr.mxu0 0.0
        %279 = vmatpush1.xpose.msra.mxu0 0.0
        %280 = vmatprep.subr.mxu0 0.0
        %281 = vmatpush1.xpose.msra.mxu0 0.0
        %282 = vmatprep.subr.mxu0 0.0
        %283 = vmatpush1.xpose.msra.mxu0 0.0
        %284 = vmatprep.subr.mxu0 0.0
        %285 = vmatpush1.xpose.msra.mxu0 0.0
        %286 = vmatprep.subr.mxu0 0.0
        %287 = vmatpush1.xpose.msra.mxu0 0.0
        %288 = vmatprep.subr.mxu0 0.0
        %289 = vmatpush1.xpose.msra.mxu0 0.0
        %290 = vmatprep.subr.mxu0 0.0
        %291 = vmatpush1.xpose.msra.mxu0 0.0
        %292 = vmatprep.subr.mxu0 0.0
        %293 = vmatpush1.xpose.msra.mxu0 0.0
        %294 = vmatprep.subr.mxu0 0.0
        %295 = vmatpush1.xpose.msra.mxu0 0.0
        %296 = vmatprep.subr.mxu0 0.0
        %297 = vmatpush1.xpose.msra.mxu0 0.0
        %298 = vmatprep.subr.mxu0 0.0
        %299 = vmatpush1.xpose.msra.mxu0 0.0
        %300 = vmatprep.subr.mxu0 0.0
        %301 = vmatpush1.xpose.msra.mxu0 0.0
        %302 = vmatprep.subr.mxu0 0.0
        %303 = vmatpush1.xpose.msra.mxu0 0.0
        %304 = vmatprep.subr.mxu0 0.0
        %305 = vmatpush1.xpose.msra.mxu0 0.0
        %306 = vmatprep.subr.mxu0 0.0
        %307 = vmatpush1.xpose.msra.mxu0 0.0
        %308 = vmatprep.subr.mxu0 0.0
        %309 = vmatpush1.xpose.msra.mxu0 0.0
        %310 = vmatprep.subr.mxu0 0.0
        %311 = vmatpush1.xpose.msra.mxu0 0.0
        %312 = vmatprep.subr.mxu0 0.0
        %313 = vmatpush1.xpose.msra.mxu0 0.0
        %314 = vmatprep.subr.mxu0 0.0
        %315 = vmatpush1.xpose.msra.mxu0 0.0
        %316 = vmatprep.subr.mxu0 0.0
        %317 = vmatpush1.xpose.msra.mxu0 0.0
        %318 = vmatprep.subr.mxu0 0.0
        %319 = vmatpush1.xpose.msra.mxu0 0.0
        %320 = vmatprep.mubr.f32.mxu0 0.0
        %321 = vmatmul.mubr.f32.gmra.mrb[0].mxu0 %v251
        %v322 = vpop.f32.mrb[0].mxu0
        %v323 = vadd.f32 0.0, %v322
        %v324 = vpop.f32.mrb[0].mxu0
        %325 = vdwg.mxu0
        %v326 = vmax.f32 %v323, 0.0
        %vm327 = vcmask 15360
        %v329 = vsel %vm327, %v326, 0
        %v332 = vsel %vm327, %v215, 0
        %v335 = vsel %vm327, %v216, 0
        %v338 = vsel %vm327, %v217, 0
        %v341 = vsel %vm327, %v218, 0
        %343 = vmatprep.subr.mxu0 0.0
        %344 = vmatpush1.xpose.msra.mxu0 %v332
        %345 = vmatprep.subr.mxu0 0.0
        %346 = vmatpush1.xpose.msra.mxu0 %v335
        %347 = vmatprep.subr.mxu0 0.0
        %348 = vmatpush1.xpose.msra.mxu0 %v338
        %349 = vmatprep.subr.mxu0 0.0
        %350 = vmatpush1.xpose.msra.mxu0 %v341
        %351 = vmatprep.subr.mxu0 0.0
        %352 = vmatpush1.xpose.msra.mxu0 0.0
        %353 = vmatprep.subr.mxu0 0.0
        %354 = vmatpush1.xpose.msra.mxu0 0.0
        %355 = vmatprep.subr.mxu0 0.0
        %356 = vmatpush1.xpose.msra.mxu0 0.0
        %357 = vmatprep.subr.mxu0 0.0
        %358 = vmatpush1.xpose.msra.mxu0 0.0
        %359 = vmatprep.subr.mxu0 0.0
        %360 = vmatpush1.xpose.msra.mxu0 0.0
        %361 = vmatprep.subr.mxu0 0.0
        %362 = vmatpush1.xpose.msra.mxu0 0.0
        %363 = vmatprep.subr.mxu0 0.0
        %364 = vmatpush1.xpose.msra.mxu0 0.0
        %365 = vmatprep.subr.mxu0 0.0
        %366 = vmatpush1.xpose.msra.mxu0 0.0
        %367 = vmatprep.subr.mxu0 0.0
        %368 = vmatpush1.xpose.msra.mxu0 0.0
        %369 = vmatprep.subr.mxu0 0.0
        %370 = vmatpush1.xpose.msra.mxu0 0.0
        %371 = vmatprep.subr.mxu0 0.0
        %372 = vmatpush1.xpose.msra.mxu0 0.0
        %373 = vmatprep.subr.mxu0 0.0
        %374 = vmatpush1.xpose.msra.mxu0 0.0
        %375 = vmatprep.subr.mxu0 0.0
        %376 = vmatpush1.xpose.msra.mxu0 0.0
        %377 = vmatprep.subr.mxu0 0.0
        %378 = vmatpush1.xpose.msra.mxu0 0.0
        %379 = vmatprep.subr.mxu0 0.0
        %380 = vmatpush1.xpose.msra.mxu0 0.0
        %381 = vmatprep.subr.mxu0 0.0
        %382 = vmatpush1.xpose.msra.mxu0 0.0
        %383 = vmatprep.subr.mxu0 0.0
        %384 = vmatpush1.xpose.msra.mxu0 0.0
        %385 = vmatprep.subr.mxu0 0.0
        %386 = vmatpush1.xpose.msra.mxu0 0.0
        %387 = vmatprep.subr.mxu0 0.0
        %388 = vmatpush1.xpose.msra.mxu0 0.0
        %389 = vmatprep.subr.mxu0 0.0
        %390 = vmatpush1.xpose.msra.mxu0 0.0
        %391 = vmatprep.subr.mxu0 0.0
        %392 = vmatpush1.xpose.msra.mxu0 0.0
        %393 = vmatprep.subr.mxu0 0.0
        %394 = vmatpush1.xpose.msra.mxu0 0.0
        %395 = vmatprep.subr.mxu0 0.0
        %396 = vmatpush1.xpose.msra.mxu0 0.0
        %397 = vmatprep.subr.mxu0 0.0
        %398 = vmatpush1.xpose.msra.mxu0 0.0
        %399 = vmatprep.subr.mxu0 0.0
        %400 = vmatpush1.xpose.msra.mxu0 0.0
        %401 = vmatprep.subr.mxu0 0.0
        %402 = vmatpush1.xpose.msra.mxu0 0.0
        %403 = vmatprep.subr.mxu0 0.0
        %404 = vmatpush1.xpose.msra.mxu0 0.0
        %405 = vmatprep.subr.mxu0 0.0
        %406 = vmatpush1.xpose.msra.mxu0 0.0
        %407 = vmatprep.mubr.f32.mxu0 0.0
        %408 = vmatmul.mubr.f32.gmra.mrb[0].mxu0 %v329
        %v409 = vpop.f32.mrb[0].mxu0
        %v410 = vadd.f32 0.0, %v409
        %v411 = vpop.f32.mrb[0].mxu0
        %412 = vdwg.mxu0
        %v413 = vxor.u32 %v410, 2147483648
        %v414 = vmul.f32 %v413, 1.442695
        %v415 = vpow.pop %v414
        %v416 = vadd.f32 %v415, 1.0
        %v417 = vrcp.pop %v416
        %v418 = vmul.f32 1.0, %v417
        %v419 = vld [vmem:[%s166] sm:$0xff]
        %v420 = vld [vmem:[%s166 + $0x8] sm:$0xff]
        %v421 = vld [vmem:[%s166 + $0x10] sm:$0xff]
        %v422 = vld [vmem:[%s166 + $0x18] sm:$0xff]
        %v423 = vld [vmem:[%s166 + $0x20] sm:$0xff]
        %v424 = vld [vmem:[%s166 + $0x28] sm:$0xff]
        %v425 = vld [vmem:[%s166 + $0x30] sm:$0xff]
        %v426 = vld [vmem:[%s166 + $0x38] sm:$0xff]
        %v427 = vlaneseq
        %v428 = vshrl.u32 %v427, 7
        %v429 = vsub.s32 0, %v428
        %v430 = vrot.slane %v418, %v429
        %432 = vbcast.lane.b32.xlu0 %v430, 256
        %v433 = vpop.permute.xlu0 %432
        %s435 = sor.u32 256, 8
        %436 = vbcast.lane.b32.xlu0 %v430, %s435
        %v437 = vpop.permute.xlu0 %436
        %s439 = sor.u32 256, 16
        %440 = vbcast.lane.b32.xlu0 %v430, %s439
        %v441 = vpop.permute.xlu0 %440
        %s443 = sor.u32 256, 24
        %444 = vbcast.lane.b32.xlu0 %v430, %s443
        %v445 = vpop.permute.xlu0 %444
        %v446 = vmul.f32 %v419, %v433
        %v447 = vmul.f32 %v420, %v433
        %v448 = vmul.f32 %v421, %v437
        %v449 = vmul.f32 %v422, %v437
        %v450 = vmul.f32 %v423, %v441
        %v451 = vmul.f32 %v424, %v441
        %v452 = vmul.f32 %v425, %v445
        %v453 = vmul.f32 %v426, %v445
        %454 = vst [vmem:[%s188] sm:$0xff] %v446
        %455 = vst [vmem:[%s188 + $0x8] sm:$0xff] %v447
        %456 = vst [vmem:[%s188 + $0x10] sm:$0xff] %v448
        %457 = vst [vmem:[%s188 + $0x18] sm:$0xff] %v449
        %458 = vst [vmem:[%s188 + $0x20] sm:$0xff] %v450
        %459 = vst [vmem:[%s188 + $0x28] sm:$0xff] %v451
        %460 = vst [vmem:[%s188 + $0x30] sm:$0xff] %v452
        %461 = vst [vmem:[%s188 + $0x38] sm:$0xff] %v453
        %s462 = sand.u32 %s96, 1
        %s463 = scalar_lea.sflag [#allocation4], %s462
        %s464 = sand.u32 %s96, 1
        %s465 = smul.addr %s464, 64
        %s466 = scalar_lea.vmem [#allocation5], %s465
        // Predicated region
        $region37: #{tpu_custom_call.1} parent=31 // pred_check
          %p467 = pneg %p106
        $region38: #{tpu_custom_call.1} parent=31 // pred_check_branch
          %469 = sbr.rel (%p467) target = $region40
        $region39: #{tpu_custom_call.1} parent=31 // pred_region
          %s471 = ssub.s32 1024, 1024
          %472 = vsyncadd %s463, %s471
          %s473 = smul.addr %s20, 8
          %s474 = smul.addr %s473, 128
          %s475 = scalar_lea.hbm %s3, %s474
          %s476 = sshll.u32 %s466, 4
          %s477 = int_to_ptr.vmem [resolvable:$true] %s476
          %482 = dma.vmem_to_hbm [thread:$0]  %s477, 1024, %s475, %s463, 256, 256, 16
        $region40: #{tpu_custom_call.1} parent=31 // pred_fallthru
          _
      $region32: #{tpu_custom_call.1} parent=5 // pred_fallthru
        _
      %p483 = scmp.le.s32.totalorder 2, %s15
      // Predicated region
      $region41: #{tpu_custom_call.1} parent=5 // pred_check
        %p484 = pneg %p483
      $region42: #{tpu_custom_call.1} parent=5 // pred_check_branch
        %486 = sbr.rel (%p484) target = $region44
      $region43: #{tpu_custom_call.1} parent=5 // pred_region
        %s487 = ssub.s32 %s15, 2
        // Predicated region
        $region45: #{tpu_custom_call.1} parent=43 // pred_check
          %p488 = pneg %p112
        $region46: #{tpu_custom_call.1} parent=43 // pred_check_branch
          %490 = sbr.rel (%p488) target = $region48
        $region47: #{tpu_custom_call.1} parent=43 // pred_region
          %s491 = sand.u32 %s97, 1
          %s492 = scalar_lea.sflag [#allocation4], %s491
          %s493 = sand.u32 %s97, 1
          %s494 = smul.addr %s493, 64
          %s495 = scalar_lea.vmem [#allocation5], %s494
          %496 = dma.done %s492, 1024
        $region48: #{tpu_custom_call.1} parent=43 // pred_fallthru
          _
      $region44: #{tpu_custom_call.1} parent=5 // pred_fallthru
        _
    $region6: #{tpu_custom_call.1} parent=1 // loop_footer
      %s19 = sadd.s32 1, %s15
    $region7: #{tpu_custom_call.1} parent=1 // loop_footer_branch
      %14 = sbr.rel target = $region3
    $region8: #{tpu_custom_call.1} parent=1 // loop_exit
      _
    %497 = vsyncpa [#allocation3], 1
    %s498 = scalar_lea.sflag [#allocation3], 1
    %499 = vsyncpa %s498, 1
    %500 = vsyncpa [#allocation4], 1
    %s501 = scalar_lea.sflag [#allocation4], 1
    %502 = vsyncpa %s501, 1

</llo_original>
